<compile_context>
chip_gen: v7x
topology: tpu7x:2x2x1
jax: 0.10.0
libtpu: 0.0.40
codegen_flags: <defaults>
</compile_context>

<pallas_src>
import jax
import jax.numpy as jnp
from jax.experimental import pallas as pl
from jax.experimental.pallas import tpu as pltpu

_LANES = 128
_SUBLANES = 8


def _make_kernel(delta: float, n_elems: int, tile_rows: int,
                 blocks_per_split: int, blocks_total: int,
                 needs_mask: bool, have_phantom: bool):
    delta = float(delta)
    two_delta = 2.0 * delta
    delta_sq = delta * delta
    last_real = blocks_total - 1

    def kernel(out_ref, tgt_ref, part_ref):
        s = pl.program_id(0)
        b = pl.program_id(1)

        # Zero the resident accumulator block at the start of each split.
        @pl.when(b == 0)
        def _():
            part_ref[...] = jnp.zeros_like(part_ref)

        block_idx = s * blocks_per_split + b

        def accumulate(mask):
            o = out_ref[...].astype(jnp.float32)
            t = tgt_ref[...].astype(jnp.float32)
            e1 = o - t
            e2 = o + t

            def huber2(e):
                # NOTE: signed compare `e < delta`, matching the PyTorch
                # reference (NOT |e| < delta).  This is 2x the loss
                # (e^2  /  2*delta*e - delta^2); the wrapper divides the
                # selected sum by 2*n, saving two 0.5* multiplies/element.
                return jnp.where(e < delta, e * e, two_delta * e - delta_sq)

            a1 = jnp.abs(e1)
            a2 = jnp.abs(e2)
            l1 = huber2(e1)
            l2 = huber2(e2)
            if mask is not None:
                zero = jnp.float32(0.0)
                a1 = jnp.where(mask, a1, zero)
                a2 = jnp.where(mask, a2, zero)
                l1 = jnp.where(mask, l1, zero)
                l2 = jnp.where(mask, l2, zero)

            def fold(x):
                # (tile_rows, 128) -> (8, 128) with plain VPU adds (major-axis
                # reduction).  The single cross-lane reduction happens once in
                # the tiny wrapper epilogue, never in the hot loop.
                return jnp.sum(
                    x.reshape(tile_rows // _SUBLANES, _SUBLANES, _LANES),
                    axis=0)

            part_ref[0, 0] += fold(a1)
            part_ref[0, 1] += fold(a2)
            part_ref[0, 2] += fold(l1)
            part_ref[0, 3] += fold(l2)

        if needs_mask:
            # Hot path: every block except the last real one is unmasked.
            @pl.when(block_idx < last_real)
            def _():
                accumulate(None)

            # Tail path (runs once total): mask the garbage OOB rows of the
            # partial last block and (when delta <= 0) the zero-padded lane
            # tail.  The mask is applied to BOTH the |e| sums and the loss
            # sums because OOB rows are undefined data, not zeros.
            @pl.when(block_idx == last_real)
            def _():
                row0 = block_idx * tile_rows
                rid = jax.lax.broadcasted_iota(
                    jnp.int32, (tile_rows, _LANES), 0)
                lid = jax.lax.broadcasted_iota(
                    jnp.int32, (tile_rows, _LANES), 1)
                flat = (row0 + rid) * _LANES + lid
                accumulate(flat < n_elems)
            # block_idx > last_real (phantom blocks from the nsplit round-up)
            # contribute nothing.
        elif have_phantom:
            @pl.when(block_idx <= last_real)
            def _():
                accumulate(None)
        else:
            accumulate(None)

    return kernel


def _default_nsplit() -> int:
    # Two TensorCores per chip only on v7x; a split axis is pure overhead on
    # single-TC chips (v5e / v6e).
    try:
        kind = jax.devices()[0].device_kind.lower()
    except Exception:
        return 1
    return 2 if ("v7" in kind or "7x" in kind) else 1


def modified_huber_loss(output: jax.Array, target: jax.Array, delta: float,
                        *, tile_rows: int = 4096,
                        nsplit: int | None = None) -> jax.Array:
    assert output.shape == target.shape
    n = int(output.size)
    o = output.reshape(-1)
    t = target.reshape(-1)

    if nsplit is None:
        nsplit = _default_nsplit()

    # Pad only to the 128-lane boundary (at most 127 elements) so the flat
    # array reshapes to a lane-dense (rows, 128) slab.  No O(N) tile padding:
    # the last row-block may be partial and is masked in-kernel.
    rows = pl.cdiv(n, _LANES)
    lane_pad = rows * _LANES - n
    if lane_pad:
        o = jnp.pad(o, (0, lane_pad))
        t = jnp.pad(t, (0, lane_pad))
    o2d = o.reshape(rows, _LANES)
    t2d = t.reshape(rows, _LANES)

    # Big tiles amortize the ~0.35us/step grid overhead; keep a multiple of 8
    # sublanes and never larger than the (rounded-up) row count.
    rows8 = ((rows + _SUBLANES - 1) // _SUBLANES) * _SUBLANES
    tile_rows = max(_SUBLANES,
                    (min(int(tile_rows), rows8) // _SUBLANES) * _SUBLANES)

    blocks_total = pl.cdiv(rows, tile_rows)
    nsplit = max(1, min(int(nsplit), blocks_total))
    blocks_per_split = pl.cdiv(blocks_total, nsplit)
    have_phantom = nsplit * blocks_per_split > blocks_total

    # The (<=127) lane-pad zeros contribute 0 to both |e| and huber(e) when
    # delta > 0, so a mask is only needed for a partial last row-block
    # (garbage OOB rows) or when delta <= 0 makes huber(0) != 0.
    needs_mask = (rows % tile_rows != 0) or (lane_pad != 0 and
                                             float(delta) <= 0.0)

    kernel = _make_kernel(delta, n, tile_rows, blocks_per_split, blocks_total,
                          needs_mask, have_phantom)

    if have_phantom:
        # Clamp phantom blocks' DMA onto the last real block (their
        # accumulation is skipped in-kernel).
        def idx_map(s, b):
            return (jnp.minimum(s * blocks_per_split + b, blocks_total - 1), 0)
    else:
        def idx_map(s, b):
            return (s * blocks_per_split + b, 0)

    in_spec = pl.BlockSpec((tile_rows, _LANES), idx_map)

    tile_bytes = tile_rows * _LANES * 4
    # 2 inputs x 2 pipeline buffers x tile + ~6-8 full-tile f32 elementwise
    # temporaries; never below the 32 MiB v6e/v7x scoped default, capped well
    # under v7x's 64 MiB physical VMEM.
    vmem_limit = int(min(max(12 * tile_bytes + (8 << 20), 32 << 20), 56 << 20))

    partials = pl.pallas_call(
        kernel,
        out_shape=jax.ShapeDtypeStruct((nsplit, 4, _SUBLANES, _LANES),
                                       jnp.float32),
        grid_spec=pltpu.PrefetchScalarGridSpec(
            num_scalar_prefetch=0,
            grid=(nsplit, blocks_per_split),
            in_specs=[in_spec, in_spec],
            out_specs=pl.BlockSpec((1, 4, _SUBLANES, _LANES),
                                   lambda s, b: (s, 0, 0, 0)),
        ),
        compiler_params=pltpu.CompilerParams(
            dimension_semantics=("parallel", "arbitrary"),
            vmem_limit_bytes=vmem_limit),
        cost_estimate=pl.CostEstimate(
            flops=18 * rows * _LANES,
            transcendentals=0,
            bytes_accessed=2 * rows * _LANES * int(o2d.dtype.itemsize)
            + nsplit * 4 * _SUBLANES * _LANES * 4),
    )(o2d, t2d)

    # Final combine: one tiny reduction + the global data-dependent select.
    # sums = [sum|e1|, sum|e2|, 2*loss_sum(e1), 2*loss_sum(e2)]
    sums = jnp.sum(partials, axis=(0, 2, 3))
    loss2 = jnp.where(sums[0] < sums[1], sums[2], sums[3])
    return loss2 / jnp.float32(2 * n)


def _reference(output, target, delta):
    e1 = output - target
    e2 = output + target
    err = jnp.where(jnp.sum(jnp.abs(e1)) < jnp.sum(jnp.abs(e2)), e1, e2)
    return jnp.mean(jnp.where(err < delta, 0.5 * err ** 2,
                              delta * (err - 0.5 * delta)))


if __name__ == "__main__":
    key = jax.random.PRNGKey(0)
    k1, k2, k3, k4 = jax.random.split(key, 4)

    # Small NCHW shape consistent with the PyTorch module's typical usage
    # (lane-aligned: 2*4*16*16 = 2048 elements -> no padding, no mask).
    x_shape = (2, 4, 16, 16)
    output = jax.random.normal(k1, x_shape, dtype=jnp.float32)
    target = jax.random.normal(k2, x_shape, dtype=jnp.float32)
    delta = 1.0

    loss = modified_huber_loss(output, target, delta)
    jax.block_until_ready(loss)
    ref = _reference(output, target, delta)
    assert jnp.allclose(loss, ref, rtol=1e-5, atol=1e-5), (loss, ref)

    # Ragged shape + negative delta: exercises the gated tail-mask path
    # (partial last block, huber(0) != 0).
    y_shape = (3, 5, 7, 11)
    output2 = jax.random.normal(k3, y_shape, dtype=jnp.float32)
    target2 = jax.random.normal(k4, y_shape, dtype=jnp.float32)
    delta2 = -0.25

    loss2 = modified_huber_loss(output2, target2, delta2)
    jax.block_until_ready(loss2)
    ref2 = _reference(output2, target2, delta2)
    assert jnp.allclose(loss2, ref2, rtol=1e-5, atol=1e-5), (loss2, ref2)

    print("KERNEL_OK")
</pallas_src>

<mosaic_0001>
module attributes {stable_mosaic.version = 11 : i64} {
  func.func @kernel(%arg0: i32, %arg1: i32, %arg2: memref<16x128xf32, #tpu.memory_space<vmem>>, %arg3: memref<16x128xf32, #tpu.memory_space<vmem>>, %arg4: memref<1x4x8x128xf32, #tpu.memory_space<vmem>>) attributes {dimension_semantics = [#tpu.dimension_semantics<parallel>, #tpu.dimension_semantics<arbitrary>], iteration_bounds = array<i64: 1, 1>, scalar_prefetch = 0 : i64, scratch_operands = 0 : i64, tpu.core_type = #tpu.core_type<tc>, window_params = [{transform_indices = @transform_0, window_bounds = array<i64: 16, 128>}, {transform_indices = @transform_1, window_bounds = array<i64: 16, 128>}, {transform_indices = @transform_2, window_bounds = array<i64: 1, 4, 8, 128>}]} {
    %c0_i32 = arith.constant 0 : i32
    %0 = arith.cmpi eq, %arg1, %c0_i32 : i32
    %1 = arith.extui %0 : i1 to i32
    %c0_i32_0 = arith.constant 0 : i32
    %2 = arith.cmpi ne, %1, %c0_i32_0 : i32
    scf.if %2 {
      %cst_42 = arith.constant 0.000000e+00 : f32
      %57 = vector.broadcast %cst_42 : f32 to vector<1x4x8x128xf32>
      %c0_43 = arith.constant 0 : index
      %c0_44 = arith.constant 0 : index
      %c0_45 = arith.constant 0 : index
      %c0_46 = arith.constant 0 : index
      %58 = vector.load %arg4[%c0_43, %c0_44, %c0_45, %c0_46] : memref<1x4x8x128xf32, #tpu.memory_space<vmem>>, vector<1x4x8x128xf32>
      tpu.vector_store %arg4[%c0_43, %c0_44, %c0_45, %c0_46], %57 {strides = array<i32>} : memref<1x4x8x128xf32, #tpu.memory_space<vmem>>, vector<1x4x8x128xf32>,
    } else {
    }
    %c0 = arith.constant 0 : index
    %c0_1 = arith.constant 0 : index
    %3 = vector.load %arg2[%c0, %c0_1] : memref<16x128xf32, #tpu.memory_space<vmem>>, vector<16x128xf32>
    %c0_2 = arith.constant 0 : index
    %c0_3 = arith.constant 0 : index
    %4 = vector.load %arg3[%c0_2, %c0_3] : memref<16x128xf32, #tpu.memory_space<vmem>>, vector<16x128xf32>
    %5 = arith.subf %3, %4 : vector<16x128xf32>
    %6 = arith.addf %3, %4 : vector<16x128xf32>
    %7 = math.absf %5 : vector<16x128xf32>
    %8 = math.absf %6 : vector<16x128xf32>
    %cst = arith.constant 1.000000e+00 : f32
    %9 = vector.broadcast %cst : f32 to vector<16x128xf32>
    %10 = arith.cmpf olt, %5, %9 : vector<16x128xf32>
    %11 = arith.mulf %5, %5 : vector<16x128xf32>
    %cst_4 = arith.constant 2.000000e+00 : f32
    %12 = vector.broadcast %cst_4 : f32 to vector<16x128xf32>
    %13 = arith.mulf %12, %5 : vector<16x128xf32>
    %cst_5 = arith.constant 1.000000e+00 : f32
    %14 = vector.broadcast %cst_5 : f32 to vector<16x128xf32>
    %15 = arith.subf %13, %14 : vector<16x128xf32>
    %16 = arith.select %10, %11, %15 : vector<16x128xi1>, vector<16x128xf32>
    %cst_6 = arith.constant 1.000000e+00 : f32
    %17 = vector.broadcast %cst_6 : f32 to vector<16x128xf32>
    %18 = arith.cmpf olt, %6, %17 : vector<16x128xf32>
    %19 = arith.mulf %6, %6 : vector<16x128xf32>
    %cst_7 = arith.constant 2.000000e+00 : f32
    %20 = vector.broadcast %cst_7 : f32 to vector<16x128xf32>
    %21 = arith.mulf %20, %6 : vector<16x128xf32>
    %cst_8 = arith.constant 1.000000e+00 : f32
    %22 = vector.broadcast %cst_8 : f32 to vector<16x128xf32>
    %23 = arith.subf %21, %22 : vector<16x128xf32>
    %24 = arith.select %18, %19, %23 : vector<16x128xi1>, vector<16x128xf32>
    %c0_9 = arith.constant 0 : index
    %c0_10 = arith.constant 0 : index
    %c0_11 = arith.constant 0 : index
    %c0_12 = arith.constant 0 : index
    %25 = vector.load %arg4[%c0_9, %c0_10, %c0_11, %c0_12] : memref<1x4x8x128xf32, #tpu.memory_space<vmem>>, vector<1x1x8x128xf32>
    %26 = vector.shape_cast %25 : vector<1x1x8x128xf32> to vector<8x128xf32>
    %27 = vector.shape_cast %7 : vector<16x128xf32> to vector<2x8x128xf32>
    %cst_13 = arith.constant dense<0.000000e+00> : vector<8x128xf32>
    %28 = vector.multi_reduction <add>, %27, %cst_13 [0] : vector<2x8x128xf32> to vector<8x128xf32>
    %29 = arith.addf %26, %28 : vector<8x128xf32>
    %c0_14 = arith.constant 0 : index
    %c0_15 = arith.constant 0 : index
    %c0_16 = arith.constant 0 : index
    %c0_17 = arith.constant 0 : index
    %30 = vector.load %arg4[%c0_14, %c0_15, %c0_16, %c0_17] : memref<1x4x8x128xf32, #tpu.memory_space<vmem>>, vector<1x1x8x128xf32>
    %31 = vector.shape_cast %30 : vector<1x1x8x128xf32> to vector<8x128xf32>
    %32 = vector.shape_cast %29 : vector<8x128xf32> to vector<1x1x8x128xf32>
    tpu.vector_store %arg4[%c0_14, %c0_15, %c0_16, %c0_17], %32 {strides = array<i32>} : memref<1x4x8x128xf32, #tpu.memory_space<vmem>>, vector<1x1x8x128xf32>,
    %c0_18 = arith.constant 0 : index
    %c1 = arith.constant 1 : index
    %c0_19 = arith.constant 0 : index
    %c0_20 = arith.constant 0 : index
    %33 = vector.load %arg4[%c0_18, %c1, %c0_19, %c0_20] : memref<1x4x8x128xf32, #tpu.memory_space<vmem>>, vector<1x1x8x128xf32>
    %34 = vector.shape_cast %33 : vector<1x1x8x128xf32> to vector<8x128xf32>
    %35 = vector.shape_cast %8 : vector<16x128xf32> to vector<2x8x128xf32>
    %cst_21 = arith.constant dense<0.000000e+00> : vector<8x128xf32>
    %36 = vector.multi_reduction <add>, %35, %cst_21 [0] : vector<2x8x128xf32> to vector<8x128xf32>
    %37 = arith.addf %34, %36 : vector<8x128xf32>
    %c0_22 = arith.constant 0 : index
    %c1_23 = arith.constant 1 : index
    %c0_24 = arith.constant 0 : index
    %c0_25 = arith.constant 0 : index
    %38 = vector.load %arg4[%c0_22, %c1_23, %c0_24, %c0_25] : memref<1x4x8x128xf32, #tpu.memory_space<vmem>>, vector<1x1x8x128xf32>
    %39 = vector.shape_cast %38 : vector<1x1x8x128xf32> to vector<8x128xf32>
    %40 = vector.shape_cast %37 : vector<8x128xf32> to vector<1x1x8x128xf32>
    tpu.vector_store %arg4[%c0_22, %c1_23, %c0_24, %c0_25], %40 {strides = array<i32>} : memref<1x4x8x128xf32, #tpu.memory_space<vmem>>, vector<1x1x8x128xf32>,
    %c0_26 = arith.constant 0 : index
    %c2 = arith.constant 2 : index
    %c0_27 = arith.constant 0 : index
    %c0_28 = arith.constant 0 : index
    %41 = vector.load %arg4[%c0_26, %c2, %c0_27, %c0_28] : memref<1x4x8x128xf32, #tpu.memory_space<vmem>>, vector<1x1x8x128xf32>
    %42 = vector.shape_cast %41 : vector<1x1x8x128xf32> to vector<8x128xf32>
    %43 = vector.shape_cast %16 : vector<16x128xf32> to vector<2x8x128xf32>
    %cst_29 = arith.constant dense<0.000000e+00> : vector<8x128xf32>
    %44 = vector.multi_reduction <add>, %43, %cst_29 [0] : vector<2x8x128xf32> to vector<8x128xf32>
    %45 = arith.addf %42, %44 : vector<8x128xf32>
    %c0_30 = arith.constant 0 : index
    %c2_31 = arith.constant 2 : index
    %c0_32 = arith.constant 0 : index
    %c0_33 = arith.constant 0 : index
    %46 = vector.load %arg4[%c0_30, %c2_31, %c0_32, %c0_33] : memref<1x4x8x128xf32, #tpu.memory_space<vmem>>, vector<1x1x8x128xf32>
    %47 = vector.shape_cast %46 : vector<1x1x8x128xf32> to vector<8x128xf32>
    %48 = vector.shape_cast %45 : vector<8x128xf32> to vector<1x1x8x128xf32>
    tpu.vector_store %arg4[%c0_30, %c2_31, %c0_32, %c0_33], %48 {strides = array<i32>} : memref<1x4x8x128xf32, #tpu.memory_space<vmem>>, vector<1x1x8x128xf32>,
    %c0_34 = arith.constant 0 : index
    %c3 = arith.constant 3 : index
    %c0_35 = arith.constant 0 : index
    %c0_36 = arith.constant 0 : index
    %49 = vector.load %arg4[%c0_34, %c3, %c0_35, %c0_36] : memref<1x4x8x128xf32, #tpu.memory_space<vmem>>, vector<1x1x8x128xf32>
    %50 = vector.shape_cast %49 : vector<1x1x8x128xf32> to vector<8x128xf32>
    %51 = vector.shape_cast %24 : vector<16x128xf32> to vector<2x8x128xf32>
    %cst_37 = arith.constant dense<0.000000e+00> : vector<8x128xf32>
    %52 = vector.multi_reduction <add>, %51, %cst_37 [0] : vector<2x8x128xf32> to vector<8x128xf32>
    %53 = arith.addf %50, %52 : vector<8x128xf32>
    %c0_38 = arith.constant 0 : index
    %c3_39 = arith.constant 3 : index
    %c0_40 = arith.constant 0 : index
    %c0_41 = arith.constant 0 : index
    %54 = vector.load %arg4[%c0_38, %c3_39, %c0_40, %c0_41] : memref<1x4x8x128xf32, #tpu.memory_space<vmem>>, vector<1x1x8x128xf32>
    %55 = vector.shape_cast %54 : vector<1x1x8x128xf32> to vector<8x128xf32>
    %56 = vector.shape_cast %53 : vector<8x128xf32> to vector<1x1x8x128xf32>
    tpu.vector_store %arg4[%c0_38, %c3_39, %c0_40, %c0_41], %56 {strides = array<i32>} : memref<1x4x8x128xf32, #tpu.memory_space<vmem>>, vector<1x1x8x128xf32>,
    return
  }
  func.func @transform_0(%arg0: i32, %arg1: i32) -> (i32, i32) {
    %c1_i32 = arith.constant 1 : i32
    %0 = arith.muli %arg0, %c1_i32 : i32
    %1 = arith.addi %0, %arg1 : i32
    %c0_i32 = arith.constant 0 : i32
    %c0_i32_0 = arith.constant 0 : i32
    return %1, %c0_i32 : i32, i32
  }
  func.func @transform_1(%arg0: i32, %arg1: i32) -> (i32, i32) {
    %c1_i32 = arith.constant 1 : i32
    %0 = arith.muli %arg0, %c1_i32 : i32
    %1 = arith.addi %0, %arg1 : i32
    %c0_i32 = arith.constant 0 : i32
    %c0_i32_0 = arith.constant 0 : i32
    return %1, %c0_i32 : i32, i32
  }
  func.func @transform_2(%arg0: i32, %arg1: i32) -> (i32, i32, i32, i32) {
    %c0_i32 = arith.constant 0 : i32
    %c0_i32_0 = arith.constant 0 : i32
    %c0_i32_1 = arith.constant 0 : i32
    %c0_i32_2 = arith.constant 0 : i32
    return %arg0, %c0_i32, %c0_i32_0, %c0_i32_1 : i32, i32, i32, i32
  }
}

</mosaic_0001>

<llo_original>
// kernel: tpu_custom_call.1
$region0: #{tpu_custom_call.1}
  #allocation0 [shape = 'u32[]', space=smem, size = 0x4, offset = 0x4, fixed_abs, tag = 'smem constant byte address 0x4 - core index']
  #allocation1 [shape = 'u32[144,128]{1,0:T(1,128)}', space=vmem, size = 0x12000, scoped, tag = 'internal scratch']
  %s0 = inlined_call_operand.hbm [shape: f32[16,128], index: 0, kind: input, shape index: {}]
  %s1 = inlined_call_operand.hbm [shape: f32[16,128], index: 1, kind: input, shape index: {}]
  %s2 = inlined_call_operand.hbm [shape: f32[1,4,8,128], index: 2, kind: output, shape index: {}]
  %s3 = sld [smem:[#allocation0]]
  $region30: #{tpu_custom_call.1} parent=0
    _
  %s5 = ssub.s32 1, %s3
  %s6 = scalar_select 0, %s5, %s3
  $region1: #{tpu_custom_call.1} parent=0
    #allocation2 [shape = 'u8[8192]{0}', space=vmem, size = 0x2000, scoped, tag = 'input window, operand 0, single buffered']
    #allocation3 [shape = 's32[1]{0}', space=sflag, size = 0x4, scoped, tag = 'scoped memory for tpu_custom_call.1']
    #allocation4 [shape = 's32[1]{0}', space=sflag, size = 0x4, scoped, tag = 'scoped memory for tpu_custom_call.1']
    #allocation5 [shape = 'u8[8192]{0}', space=vmem, size = 0x2000, scoped, tag = 'input window, operand 1, single buffered']
    #allocation6 [shape = 's32[1]{0}', space=sflag, size = 0x4, scoped, tag = 'scoped memory for tpu_custom_call.1']
    #allocation7 [shape = 'u8[16384]{0}', space=vmem, size = 0x4000, scoped, tag = 'output window, operand 0, single buffered']
    %7 = vsyncpa [#allocation3], 0
    %8 = vsyncpa [#allocation6], 0
    %9 = vsyncpa [#allocation4], 0
    // Predicated region
    $region2: #{tpu_custom_call.1} parent=1 // pred_check
      _
    $region3: #{tpu_custom_call.1} parent=1 // pred_check_branch
      %11 = sbr.rel (0) target = $region5
    $region4: #{tpu_custom_call.1} parent=1 // pred_region
      %s12 = sadd.s32 0, 0
      %s13 = smul.u32 2, %s12
      %s15 = ssub.s32 256, 256
      %16 = vsyncadd [#allocation3], %s15
      %s17 = smul.addr %s13, 128
      %s18 = scalar_lea.hbm %s0, %s17
      %s19 = sshll.u32 [#allocation2], 4
      %s20 = int_to_ptr.vmem [resolvable:$true] %s19
      %25 = dma.hbm_to_vmem [thread:$0]  %s18, 256, %s20, [#allocation3], 128, 128, 8
    $region5: #{tpu_custom_call.1} parent=1 // pred_fallthru
      _
    // Predicated region
    $region6: #{tpu_custom_call.1} parent=1 // pred_check
      _
    $region7: #{tpu_custom_call.1} parent=1 // pred_check_branch
      %27 = sbr.rel (0) target = $region9
    $region8: #{tpu_custom_call.1} parent=1 // pred_region
      %s28 = sadd.s32 0, 0
      %s29 = smul.u32 2, %s28
      %s31 = ssub.s32 256, 256
      %32 = vsyncadd [#allocation6], %s31
      %s33 = smul.addr %s29, 128
      %s34 = scalar_lea.hbm %s1, %s33
      %s35 = sshll.u32 [#allocation5], 4
      %s36 = int_to_ptr.vmem [resolvable:$true] %s35
      %41 = dma.hbm_to_vmem [thread:$0]  %s34, 256, %s36, [#allocation6], 128, 128, 8
    $region9: #{tpu_custom_call.1} parent=1 // pred_fallthru
      _
    // Predicated region
    $region10: #{tpu_custom_call.1} parent=1 // pred_check
      _
    $region11: #{tpu_custom_call.1} parent=1 // pred_check_branch
      %43 = sbr.rel (0) target = $region13
    $region12: #{tpu_custom_call.1} parent=1 // pred_region
      %44 = dma.done [#allocation3], 256
    $region13: #{tpu_custom_call.1} parent=1 // pred_fallthru
      _
    // Predicated region
    $region14: #{tpu_custom_call.1} parent=1 // pred_check
      _
    $region15: #{tpu_custom_call.1} parent=1 // pred_check_branch
      %46 = sbr.rel (0) target = $region17
    $region16: #{tpu_custom_call.1} parent=1 // pred_region
      %47 = dma.done [#allocation6], 256
    $region17: #{tpu_custom_call.1} parent=1 // pred_fallthru
      _
    %s48 = sadd.s32 0, 0
    %s49 = smul.u32 2, %s48
    %s50 = sadd.s32 0, 0
    %s51 = smul.u32 2, %s50
    %p52 = scmp.eq.s32.totalorder 0, 0
    // Predicated region
    $region18: #{tpu_custom_call.1} parent=1 // pred_check
      %p53 = pneg %p52
    $region19: #{tpu_custom_call.1} parent=1 // pred_check_branch
      %55 = sbr.rel (%p53) target = $region21
    $region20: #{tpu_custom_call.1} parent=1 // pred_region
      %56 = vst [vmem:[#allocation7] sm:$0xff] 0.0
      %57 = vst [vmem:[#allocation7 + $0x8] sm:$0xff] 0.0
      %58 = vst [vmem:[#allocation7 + $0x10] sm:$0xff] 0.0
      %59 = vst [vmem:[#allocation7 + $0x18] sm:$0xff] 0.0
    $region21: #{tpu_custom_call.1} parent=1 // pred_fallthru
      _
    %v60 = vld [vmem:[#allocation2] sm:$0xff]
    %v61 = vld [vmem:[#allocation2 + $0x8] sm:$0xff]
    %v62 = vld [vmem:[#allocation5] sm:$0xff]
    %v63 = vld [vmem:[#allocation5 + $0x8] sm:$0xff]
    %v64 = vsub.f32 %v60, %v62
    %v65 = vsub.f32 %v61, %v63
    %v66 = vadd.f32 %v60, %v62
    %v67 = vadd.f32 %v61, %v63
    %v68 = vand.u32 2147483647, %v64
    %v69 = vand.u32 2147483647, %v65
    %v70 = vand.u32 2147483647, %v66
    %v71 = vand.u32 2147483647, %v67
    %vm72 = vcmp.lt.f32.partialorder %v64, 1.0
    %vm73 = vcmp.lt.f32.partialorder %v65, 1.0
    %v74 = vmul.f32 %v64, %v64
    %v75 = vmul.f32 %v65, %v65
    %v76 = vmul.f32 %v64, 2.0
    %v77 = vmul.f32 %v65, 2.0
    %v78 = vsub.f32 %v76, 1.0
    %v79 = vsub.f32 %v77, 1.0
    %v80 = vsel %vm72, %v74, %v78
    %v81 = vsel %vm73, %v75, %v79
    %vm82 = vcmp.lt.f32.partialorder %v66, 1.0
    %vm83 = vcmp.lt.f32.partialorder %v67, 1.0
    %v84 = vmul.f32 %v66, %v66
    %v85 = vmul.f32 %v67, %v67
    %v86 = vmul.f32 %v66, 2.0
    %v87 = vmul.f32 %v67, 2.0
    %v88 = vsub.f32 %v86, 1.0
    %v89 = vsub.f32 %v87, 1.0
    %v90 = vsel %vm82, %v84, %v88
    %v91 = vsel %vm83, %v85, %v89
    %v92 = vld [vmem:[#allocation7] sm:$0xff]
    %v93 = vadd.f32 %v68, %v69
    %v94 = vadd.f32 %v92, %v93
    %95 = vst [vmem:[#allocation7] sm:$0xff] %v94
    %s96 = scalar_lea.vmem [#allocation7], 8
    %v97 = vld [vmem:[%s96] sm:$0xff]
    %v98 = vadd.f32 %v70, %v71
    %v99 = vadd.f32 %v97, %v98
    %100 = vst [vmem:[%s96] sm:$0xff] %v99
    %s101 = scalar_lea.vmem [#allocation7], 16
    %v102 = vld [vmem:[%s101] sm:$0xff]
    %v103 = vadd.f32 %v80, %v81
    %v104 = vadd.f32 %v102, %v103
    %105 = vst [vmem:[%s101] sm:$0xff] %v104
    %s106 = scalar_lea.vmem [#allocation7], 24
    %v107 = vld [vmem:[%s106] sm:$0xff]
    %v108 = vadd.f32 %v90, %v91
    %v109 = vadd.f32 %v107, %v108
    %110 = vst [vmem:[%s106] sm:$0xff] %v109
    // Predicated region
    $region22: #{tpu_custom_call.1} parent=1 // pred_check
      _
    $region23: #{tpu_custom_call.1} parent=1 // pred_check_branch
      %112 = sbr.rel (0) target = $region25
    $region24: #{tpu_custom_call.1} parent=1 // pred_region
      %s114 = ssub.s32 512, 512
      %115 = vsyncadd [#allocation4], %s114
      %s116 = sshll.u32 [#allocation7], 4
      %s117 = int_to_ptr.vmem [resolvable:$true] %s116
      %122 = dma.vmem_to_hbm [thread:$0]  %s117, 512, %s2, [#allocation4], 128, 128, 8
    $region25: #{tpu_custom_call.1} parent=1 // pred_fallthru
      _
    // Predicated region
    $region26: #{tpu_custom_call.1} parent=1 // pred_check
      _
    $region27: #{tpu_custom_call.1} parent=1 // pred_check_branch
      %124 = sbr.rel (0) target = $region29
    $region28: #{tpu_custom_call.1} parent=1 // pred_region
      %125 = dma.done [#allocation4], 512
    $region29: #{tpu_custom_call.1} parent=1 // pred_fallthru
      _
    %126 = vsyncpa [#allocation3], 1
    %127 = vsyncpa [#allocation6], 1
    %128 = vsyncpa [#allocation4], 1

</llo_original>
